<compile_context>
chip_gen: v7x
topology: tpu7x:2x2x1
jax: 0.10.0
libtpu: 0.0.40
codegen_flags: <defaults>
</compile_context>

<pallas_src>
import numpy as np
import jax
import jax.numpy as jnp
from jax.experimental import pallas as pl
from jax.experimental.pallas import tpu as pltpu

_LANE = 128
_SUBLANE = 8
_MAX_BLOCK_ROWS = 4096                    # 4096 * 128 * 4 B = 2 MiB / f32 operand
_PIPELINE_BYTES = 16 * 1024 * 1024        # budget for double-buffered streams
_VMEM_LIMIT = 40 * 1024 * 1024            # < v7x 64 MiB physical, > v5e 16 MiB default
_N_CORE_SPLITS = 2                        # leading parallel axis (v7x megacore)
_PALLAS_MIN_ELEMENTS = 1 << 20            # below this, XLA fusion wins
_reduction_modes = ['none', 'mean', 'sum']


# ----------------------------------------------------------------------------
# Helpers
# ----------------------------------------------------------------------------
def _ceil_div(a, b):
    return -(-a // b)


def _compiler_params(semantics):
    return pltpu.CompilerParams(dimension_semantics=semantics,
                                vmem_limit_bytes=_VMEM_LIMIT)


def _as_rows(x):
    # Free reshape (bitcast) for contiguous inputs whose size is a multiple
    # of 128 — no padding, no copies.
    return x.reshape(-1, _LANE)


def _block_rows(rows, n_streams):
    """Largest multiple-of-8 block row count that fits the pipelining budget."""
    bm = _PIPELINE_BYTES // (n_streams * 2 * _LANE * 4)   # 2 = double buffering
    bm = min(bm, _MAX_BLOCK_ROWS, rows)
    return max(_SUBLANE, (bm // _SUBLANE) * _SUBLANE)


# ----------------------------------------------------------------------------
# Fused reduction kernels: one HBM pass, VMEM-resident (8,128) accumulators
# ----------------------------------------------------------------------------
def _pallas_sq_err_sum(pred, target, weight=None):
    """sum((pred-target)^2 [* weight]) in one pass.

    Returns a f32 scalar (and the weight sum if `weight` is given).
    """
    p2, t2 = _as_rows(pred), _as_rows(target)
    rows = p2.shape[0]
    n_streams = 2 if weight is None else 3
    bm = _block_rows(rows, n_streams)
    nblocks = _ceil_div(rows, bm)
    nbh = _ceil_div(nblocks, _N_CORE_SPLITS)          # blocks per parallel half
    # Mask is needed when the last block is ragged or a half re-reads a
    # (clamped) duplicate block.
    needs_mask = (rows % bm != 0) or (nblocks % _N_CORE_SPLITS != 0)

    def in_map(i, j):
        # Clamp fully out-of-range duplicate blocks back in bounds; their
        # contribution is masked to zero inside the kernel.
        return (jnp.minimum(i * nbh + j, nblocks - 1), 0)

    in_spec = pl.BlockSpec((bm, _LANE), in_map)
    acc_spec = pl.BlockSpec((_SUBLANE, _LANE), lambda i, j: (i, 0))
    acc_shape = jax.ShapeDtypeStruct((_N_CORE_SPLITS * _SUBLANE, _LANE),
                                     jnp.float32)

    def row_mask(i, j):
        row0 = (i * nbh + j) * bm
        iota = jax.lax.broadcasted_iota(jnp.int32, (bm, 1), 0)
        return (row0 + iota) < rows                    # (bm, 1) bool

    def fold(x):                                       # (bm,128) -> (8,128) VALU adds
        return x.reshape(bm // _SUBLANE, _SUBLANE, _LANE).sum(axis=0)

    if weight is None:
        def kernel(p_ref, t_ref, acc_ref):
            i, j = pl.program_id(0), pl.program_id(1)

            @pl.when(j == 0)
            def _():
                acc_ref[...] = jnp.zeros_like(acc_ref)

            d = (p_ref[...] - t_ref[...]).astype(jnp.float32)
            sq = d * d
            if needs_mask:
                sq = jnp.where(row_mask(i, j), sq, 0.0)
            acc_ref[...] += fold(sq)

        acc = pl.pallas_call(
            kernel,
            out_shape=acc_shape,
            grid_spec=pltpu.PrefetchScalarGridSpec(
                num_scalar_prefetch=0,
                grid=(_N_CORE_SPLITS, nbh),
                in_specs=[in_spec, in_spec],
                out_specs=acc_spec),
            compiler_params=_compiler_params(("parallel", "arbitrary")),
        )(p2, t2)
        return jnp.sum(acc)

    w2 = _as_rows(weight)

    def kernel(p_ref, t_ref, w_ref, acc_ref, wacc_ref):
        i, j = pl.program_id(0), pl.program_id(1)

        @pl.when(j == 0)
        def _():
            acc_ref[...] = jnp.zeros_like(acc_ref)
            wacc_ref[...] = jnp.zeros_like(wacc_ref)

        d = (p_ref[...] - t_ref[...]).astype(jnp.float32)
        w = w_ref[...].astype(jnp.float32)
        sq = d * d
        if needs_mask:
            m = row_mask(i, j)
            sq = jnp.where(m, sq, 0.0)                 # same mask for both sums
            w = jnp.where(m, w, 0.0)
        acc_ref[...] += fold(sq * w)
        wacc_ref[...] += fold(w)

    acc, wacc = pl.pallas_call(
        kernel,
        out_shape=(acc_shape, acc_shape),
        grid_spec=pltpu.PrefetchScalarGridSpec(
            num_scalar_prefetch=0,
            grid=(_N_CORE_SPLITS, nbh),
            in_specs=[in_spec, in_spec, in_spec],
            out_specs=[acc_spec, acc_spec]),
        compiler_params=_compiler_params(("parallel", "arbitrary")),
    )(p2, t2, w2)
    return jnp.sum(acc), jnp.sum(wacc)


# ----------------------------------------------------------------------------
# Element-wise ('none') kernels
# ----------------------------------------------------------------------------
def _pallas_sq_err_elementwise(pred, target, weight=None):
    p2, t2 = _as_rows(pred), _as_rows(target)
    rows = p2.shape[0]
    n_streams = 3 if weight is None else 4
    bm = _block_rows(rows, n_streams)
    nblocks = _ceil_div(rows, bm)
    blk = pl.BlockSpec((bm, _LANE), lambda i: (i, 0))
    # No masking needed: out-of-bounds rows of the last partial block are
    # dropped on store, and their values never touch valid output rows.

    if weight is None:
        def kernel(p_ref, t_ref, o_ref):
            d = (p_ref[...] - t_ref[...]).astype(jnp.float32)
            o_ref[...] = (d * d).astype(o_ref.dtype)
        in_specs = [blk, blk]
        args = (p2, t2)
    else:
        def kernel(p_ref, t_ref, w_ref, o_ref):
            d = (p_ref[...] - t_ref[...]).astype(jnp.float32)
            o_ref[...] = (d * d * w_ref[...].astype(jnp.float32)).astype(o_ref.dtype)
        in_specs = [blk, blk, blk]
        args = (p2, t2, _as_rows(weight))

    out = pl.pallas_call(
        kernel,
        out_shape=jax.ShapeDtypeStruct((rows, _LANE), pred.dtype),
        grid_spec=pltpu.PrefetchScalarGridSpec(
            num_scalar_prefetch=0,
            grid=(nblocks,),
            in_specs=in_specs,
            out_specs=blk),
        compiler_params=_compiler_params(("parallel",)),
    )(*args)
    return out.reshape(pred.shape)


# ----------------------------------------------------------------------------
# Fused XLA fallback (tiny tensors, non-128-divisible sizes, 1-channel weight)
# ----------------------------------------------------------------------------
def _mse_jnp(pred, target, weight, reduction):
    loss = jnp.square(pred.astype(jnp.float32) - target.astype(jnp.float32))
    if weight is not None:
        loss = loss * weight.astype(jnp.float32)       # XLA fuses the broadcast
    if reduction == 'none':
        return loss.astype(pred.dtype)
    if reduction == 'sum':
        return jnp.sum(loss).astype(pred.dtype)
    # 'mean'
    if weight is None:
        return jnp.mean(loss).astype(pred.dtype)
    denom = jnp.sum(weight.astype(jnp.float32))
    if weight.ndim >= 2 and weight.shape[1] == 1:      # basicsr: weight.sum() * C
        denom = denom * pred.shape[1]
    return (jnp.sum(loss) / denom).astype(pred.dtype)


# ----------------------------------------------------------------------------
# Python-level op (mirrors @weighted_loss mse_loss) and module
# ----------------------------------------------------------------------------
def mse_loss(pred, target, weight=None, reduction='mean', *, force_pallas=False):
    if reduction not in _reduction_modes:
        raise ValueError(f'Unsupported reduction mode: {reduction}. '
                         f'Supported ones are: {_reduction_modes}')
    total = int(pred.size)
    full_weight = weight is not None and tuple(weight.shape) == tuple(pred.shape)
    lane_ok = (total % _LANE == 0) and (total // _LANE >= _SUBLANE)
    use_pallas = lane_ok and (force_pallas or total >= _PALLAS_MIN_ELEMENTS)
    if weight is not None and not full_weight:
        # Single-channel (broadcast) weight: keep it at native size and let XLA
        # fuse the broadcast — no materialized pred-sized weight tensor.
        # TODO(synk): dedicated Pallas path reusing the (N,1,H,W) weight block
        # across C via the BlockSpec index_map.
        use_pallas = False
    if not use_pallas:
        return _mse_jnp(pred, target, weight, reduction)

    if reduction == 'none':
        return _pallas_sq_err_elementwise(pred, target, weight)
    if weight is None:
        s = _pallas_sq_err_sum(pred, target)
        out = s / total if reduction == 'mean' else s
    else:
        loss_sum, w_sum = _pallas_sq_err_sum(pred, target, weight)
        out = loss_sum / w_sum if reduction == 'mean' else loss_sum
    return out.astype(pred.dtype)


class MSELoss:
    """MSE (L2) loss — JAX/Pallas equivalent of the basicsr MSELoss module."""

    def __init__(self, loss_weight=1.0, reduction='mean'):
        if reduction not in _reduction_modes:
            raise ValueError(f'Unsupported reduction mode: {reduction}. '
                             f'Supported ones are: {_reduction_modes}')
        self.loss_weight = loss_weight
        self.reduction = reduction

    def __call__(self, pred, target, weight=None, **kwargs):
        return self.loss_weight * mse_loss(
            pred, target, weight, reduction=self.reduction,
            force_pallas=bool(kwargs.get('force_pallas', False)))


# ----------------------------------------------------------------------------
if __name__ == "__main__":
    key = jax.random.PRNGKey(0)
    kp, kt, kw = jax.random.split(key, 3)

    # Small shapes per the module docstring: (N, C, H, W) = (2, 4, 16, 16).
    shape = (2, 4, 16, 16)
    pred = jax.random.normal(kp, shape, dtype=jnp.float32)
    target = jax.random.normal(kt, shape, dtype=jnp.float32)
    weight = jax.random.uniform(kw, shape, dtype=jnp.float32)

    p_np = np.asarray(pred, dtype=np.float64)
    t_np = np.asarray(target, dtype=np.float64)
    w_np = np.asarray(weight, dtype=np.float64)
    sq = (p_np - t_np) ** 2

    # --- Pallas kernels (forced so the small demo exercises every kernel) ---
    out = jax.block_until_ready(
        mse_loss(pred, target, reduction='mean', force_pallas=True))
    np.testing.assert_allclose(np.asarray(out), sq.mean(), rtol=1e-5, atol=1e-6)

    out = jax.block_until_ready(
        mse_loss(pred, target, reduction='sum', force_pallas=True))
    np.testing.assert_allclose(np.asarray(out), sq.sum(), rtol=1e-5, atol=1e-4)

    out = jax.block_until_ready(
        mse_loss(pred, target, reduction='none', force_pallas=True))
    np.testing.assert_allclose(np.asarray(out), sq, rtol=1e-5, atol=1e-6)

    out = jax.block_until_ready(
        mse_loss(pred, target, weight, reduction='none', force_pallas=True))
    np.testing.assert_allclose(np.asarray(out), sq * w_np, rtol=1e-5, atol=1e-6)

    out = jax.block_until_ready(
        mse_loss(pred, target, weight, reduction='sum', force_pallas=True))
    np.testing.assert_allclose(np.asarray(out), (sq * w_np).sum(),
                               rtol=1e-5, atol=1e-4)

    out = jax.block_until_ready(
        mse_loss(pred, target, weight, reduction='mean', force_pallas=True))
    np.testing.assert_allclose(np.asarray(out), (sq * w_np).sum() / w_np.sum(),
                               rtol=1e-5, atol=1e-6)

    # --- MSELoss module API (tiny input -> fused XLA fallback path) --------
    loss = jax.block_until_ready(
        MSELoss(loss_weight=0.5, reduction='mean')(pred, target, weight))
    np.testing.assert_allclose(np.asarray(loss),
                               0.5 * (sq * w_np).sum() / w_np.sum(),
                               rtol=1e-5, atol=1e-6)

    # Single-channel weight (basicsr weight_reduce_loss semantics); kept at
    # native size, no materialized broadcast.
    w1 = jax.random.uniform(kw, (2, 1, 16, 16), dtype=jnp.float32)
    w1_np = np.asarray(w1, dtype=np.float64)
    loss = jax.block_until_ready(MSELoss(reduction='mean')(pred, target, w1))
    ref = (sq * w1_np).sum() / (w1_np.sum() * shape[1])
    np.testing.assert_allclose(np.asarray(loss), ref, rtol=1e-5, atol=1e-6)

    # --- Larger ragged case: exercises auto dispatch to Pallas, the ragged
    #     last-block mask and the 2-way (v7x) core split of the reduction. ---
    big = (1, 3, 2736, 128)               # 1,050,624 elements -> 8208 rows of 128
    bp = jax.random.normal(kp, big, dtype=jnp.float32)
    bt = jax.random.normal(kt, big, dtype=jnp.float32)
    ref = np.mean((np.asarray(bp, np.float64) - np.asarray(bt, np.float64)) ** 2)
    out = jax.block_until_ready(MSELoss()(bp, bt))
    np.testing.assert_allclose(np.asarray(out), ref, rtol=1e-4)

    print("KERNEL_OK")
</pallas_src>

<mosaic_0001>
module attributes {stable_mosaic.version = 11 : i64} {
  func.func @kernel(%arg0: i32, %arg1: i32, %arg2: memref<16x128xf32, #tpu.memory_space<vmem>>, %arg3: memref<16x128xf32, #tpu.memory_space<vmem>>, %arg4: memref<8x128xf32, #tpu.memory_space<vmem>>) attributes {dimension_semantics = [#tpu.dimension_semantics<parallel>, #tpu.dimension_semantics<arbitrary>], iteration_bounds = array<i64: 2, 1>, scalar_prefetch = 0 : i64, scratch_operands = 0 : i64, tpu.core_type = #tpu.core_type<tc>, window_params = [{transform_indices = @transform_0, window_bounds = array<i64: 16, 128>}, {transform_indices = @transform_1, window_bounds = array<i64: 16, 128>}, {transform_indices = @transform_2, window_bounds = array<i64: 8, 128>}]} {
    %c0_i32 = arith.constant 0 : i32
    %0 = arith.cmpi eq, %arg1, %c0_i32 : i32
    %1 = arith.extui %0 : i1 to i32
    %c0_i32_0 = arith.constant 0 : i32
    %2 = arith.cmpi ne, %1, %c0_i32_0 : i32
    scf.if %2 {
      %cst_10 = arith.constant 0.000000e+00 : f32
      %24 = vector.broadcast %cst_10 : f32 to vector<8x128xf32>
      %c0_11 = arith.constant 0 : index
      %c0_12 = arith.constant 0 : index
      %25 = vector.load %arg4[%c0_11, %c0_12] : memref<8x128xf32, #tpu.memory_space<vmem>>, vector<8x128xf32>
      tpu.vector_store %arg4[%c0_11, %c0_12], %24 {strides = array<i32>} : memref<8x128xf32, #tpu.memory_space<vmem>>, vector<8x128xf32>,
    } else {
    }
    %c0 = arith.constant 0 : index
    %c0_1 = arith.constant 0 : index
    %3 = vector.load %arg2[%c0, %c0_1] : memref<16x128xf32, #tpu.memory_space<vmem>>, vector<16x128xf32>
    %c0_2 = arith.constant 0 : index
    %c0_3 = arith.constant 0 : index
    %4 = vector.load %arg3[%c0_2, %c0_3] : memref<16x128xf32, #tpu.memory_space<vmem>>, vector<16x128xf32>
    %5 = arith.subf %3, %4 : vector<16x128xf32>
    %6 = arith.mulf %5, %5 : vector<16x128xf32>
    %c1_i32 = arith.constant 1 : i32
    %7 = arith.muli %arg0, %c1_i32 : i32
    %8 = arith.addi %7, %arg1 : i32
    %c16_i32 = arith.constant 16 : i32
    %9 = arith.muli %8, %c16_i32 : i32
    %10 = tpu.iota {dimensions = array<i32: 0>} : vector<16x1xi32>
    %11 = vector.broadcast %9 : i32 to vector<16x1xi32>
    %12 = arith.addi %11, %10 : vector<16x1xi32>
    %c16_i32_4 = arith.constant 16 : i32
    %13 = vector.broadcast %c16_i32_4 : i32 to vector<16x1xi32>
    %14 = arith.cmpi slt, %12, %13 : vector<16x1xi32>
    %cst = arith.constant 0.000000e+00 : f32
    %15 = vector.shape_cast %14 : vector<16x1xi1> to vector<16x1xi1>
    %16 = vector.broadcast %15 : vector<16x1xi1> to vector<16x128xi1>
    %17 = vector.broadcast %cst : f32 to vector<16x128xf32>
    %18 = arith.select %16, %6, %17 : vector<16x128xi1>, vector<16x128xf32>
    %c0_5 = arith.constant 0 : index
    %c0_6 = arith.constant 0 : index
    %19 = vector.load %arg4[%c0_5, %c0_6] : memref<8x128xf32, #tpu.memory_space<vmem>>, vector<8x128xf32>
    %20 = vector.shape_cast %18 : vector<16x128xf32> to vector<2x8x128xf32>
    %cst_7 = arith.constant dense<0.000000e+00> : vector<8x128xf32>
    %21 = vector.multi_reduction <add>, %20, %cst_7 [0] : vector<2x8x128xf32> to vector<8x128xf32>
    %22 = arith.addf %19, %21 : vector<8x128xf32>
    %c0_8 = arith.constant 0 : index
    %c0_9 = arith.constant 0 : index
    %23 = vector.load %arg4[%c0_8, %c0_9] : memref<8x128xf32, #tpu.memory_space<vmem>>, vector<8x128xf32>
    tpu.vector_store %arg4[%c0_8, %c0_9], %22 {strides = array<i32>} : memref<8x128xf32, #tpu.memory_space<vmem>>, vector<8x128xf32>,
    return
  }
  func.func @transform_0(%arg0: i32, %arg1: i32) -> (i32, i32) {
    %c1_i32 = arith.constant 1 : i32
    %0 = arith.muli %arg0, %c1_i32 : i32
    %1 = arith.addi %0, %arg1 : i32
    %c0_i32 = arith.constant 0 : i32
    %2 = arith.minsi %1, %c0_i32 : i32
    %c0_i32_0 = arith.constant 0 : i32
    %c0_i32_1 = arith.constant 0 : i32
    return %2, %c0_i32_0 : i32, i32
  }
  func.func @transform_1(%arg0: i32, %arg1: i32) -> (i32, i32) {
    %c1_i32 = arith.constant 1 : i32
    %0 = arith.muli %arg0, %c1_i32 : i32
    %1 = arith.addi %0, %arg1 : i32
    %c0_i32 = arith.constant 0 : i32
    %2 = arith.minsi %1, %c0_i32 : i32
    %c0_i32_0 = arith.constant 0 : i32
    %c0_i32_1 = arith.constant 0 : i32
    return %2, %c0_i32_0 : i32, i32
  }
  func.func @transform_2(%arg0: i32, %arg1: i32) -> (i32, i32) {
    %c0_i32 = arith.constant 0 : i32
    %c0_i32_0 = arith.constant 0 : i32
    return %arg0, %c0_i32 : i32, i32
  }
}

</mosaic_0001>

<llo_original>
// kernel: tpu_custom_call.1
$region0: #{tpu_custom_call.1}
  #allocation0 [shape = 'u32[]', space=smem, size = 0x4, offset = 0x4, fixed_abs, tag = 'smem constant byte address 0x4 - core index']
  #allocation1 [shape = 'u32[144,128]{1,0:T(1,128)}', space=vmem, size = 0x12000, scoped, tag = 'internal scratch']
  %s0 = inlined_call_operand.hbm [shape: f32[16,128], index: 0, kind: input, shape index: {}]
  %s1 = inlined_call_operand.hbm [shape: f32[16,128], index: 1, kind: input, shape index: {}]
  %s2 = inlined_call_operand.hbm [shape: f32[16,128], index: 2, kind: output, shape index: {}]
  %s3 = sld [smem:[#allocation0]]
  $region53: #{tpu_custom_call.1} parent=0
    _
  %s5 = ssub.s32 1, %s3
  %s6 = scalar_select 0, %s5, %s3
  $region1: #{tpu_custom_call.1} parent=0
    #allocation2 [shape = 'u8[16384]{0}', space=vmem, size = 0x4000, scoped, tag = 'input window, operand 0']
    #allocation3 [shape = 's32[2]{0}', space=sflag, size = 0x8, scoped, tag = 'scoped memory for tpu_custom_call.1']
    #allocation4 [shape = 's32[2]{0}', space=sflag, size = 0x8, scoped, tag = 'scoped memory for tpu_custom_call.1']
    #allocation5 [shape = 'u8[16384]{0}', space=vmem, size = 0x4000, scoped, tag = 'input window, operand 1']
    #allocation6 [shape = 's32[2]{0}', space=sflag, size = 0x8, scoped, tag = 'scoped memory for tpu_custom_call.1']
    #allocation7 [shape = 'u8[8192]{0}', space=vmem, size = 0x2000, scoped, tag = 'output window, operand 0']
    %7 = vsyncpa [#allocation3], 0
    %s8 = scalar_lea.sflag [#allocation3], 1
    %9 = vsyncpa %s8, 0
    %10 = vsyncpa [#allocation6], 0
    %s11 = scalar_lea.sflag [#allocation6], 1
    %12 = vsyncpa %s11, 0
    %13 = vsyncpa [#allocation4], 0
    %s14 = scalar_lea.sflag [#allocation4], 1
    %15 = vsyncpa %s14, 0
    loop: start=0, step=1, limit=4
    $region2: #{tpu_custom_call.1} parent=1 // loop_pre_header
      _
    $region3: #{tpu_custom_call.1} parent=1 // loop_header
      %s17 = sphi 0, %s21
      %p18 = scmp.ge.s32.totalorder %s17, 4
      %s24 = sphi 0, %s36
      %s25 = sphi 0, %s32
      %s26 = sphi 0, %s24
      %s27 = sphi 0, %s25
      %s28 = sphi 0, %s26
      %s29 = sphi 0, %s27
      %s45 = sphi 0, %s47
      %s48 = sphi 0, %s45
      %s49 = sphi 0, %s48
      %s65 = sphi 0, %s49
      %s77 = sphi 0, %s79
      %s80 = sphi 0, %s77
      %s81 = sphi 0, %s80
      %s97 = sphi 0, %s81
      %s103 = sphi 0, %s105
      %s106 = sphi 0, %s103
      %s107 = sphi 0, %s106
      %s123 = sphi 0, %s107
    $region4: #{tpu_custom_call.1} parent=1 // loop_header_branch
      %20 = sbr.rel (%p18) target = $region8
    $region5: #{tpu_custom_call.1} parent=1 // loop_body
      %s22 = ssub.s32 %s17, 1
      %s23 = ssub.s32 %s17, 2
      %s30 = sadd.s32 1, %s25
      %p31 = scmp.ge.s32.totalorder %s30, 1
      %s32 = scalar_select %p31, 0, %s30
      %s33 = sadd.s32 1, %s24
      %s34 = scalar_select %p31, %s33, %s24
      %p35 = scmp.ge.s32.totalorder %s34, 2
      %s36 = scalar_select %p35, 0, %s34
      %s37 = sadd.s32 %s24, %s25
      %p38 = scmp.lt.s32.totalorder %s37, 0
      %s39 = scalar_select %p38, %s37, 0
      %s40 = sadd.s32 %s36, %s32
      %p41 = scmp.lt.s32.totalorder %s40, 0
      %s42 = scalar_select %p41, %s40, 0
      %s43 = ssub.s32 %s39, %s42
      %p44 = scmp.eq.s32.totalorder %s43, 0
      %s46 = sadd.s32 %s45, 1
      %s47 = scalar_select %p44, %s45, %s46
      %p50 = pneg %p44
      %p51 = scmp.eq.s32.totalorder %s17, 1
      %p52 = por %p50, %p51
      %p53 = scmp.ne.s32.totalorder %s45, %s48
      %p54 = scmp.eq.s32.totalorder %s17, 0
      %p55 = por %p53, %p54
      %p56 = scmp.ne.s32.totalorder %s45, %s48
      %p57 = scmp.eq.s32.totalorder %s22, 1
      %p58 = por %p56, %p57
      %p59 = scmp.ne.s32.totalorder %s48, %s49
      %p60 = scmp.eq.s32.totalorder %s22, 0
      %p61 = por %p59, %p60
      %p62 = scmp.ne.s32.totalorder %s48, %s49
      %p63 = scmp.eq.s32.totalorder %s23, 1
      %p64 = por %p62, %p63
      %p66 = scmp.ne.s32.totalorder %s49, %s65
      %p67 = scmp.eq.s32.totalorder %s23, 0
      %p68 = por %p66, %p67
      %s69 = sadd.s32 %s24, %s25
      %p70 = scmp.lt.s32.totalorder %s69, 0
      %s71 = scalar_select %p70, %s69, 0
      %s72 = sadd.s32 %s36, %s32
      %p73 = scmp.lt.s32.totalorder %s72, 0
      %s74 = scalar_select %p73, %s72, 0
      %s75 = ssub.s32 %s71, %s74
      %p76 = scmp.eq.s32.totalorder %s75, 0
      %s78 = sadd.s32 %s77, 1
      %s79 = scalar_select %p76, %s77, %s78
      %p82 = pneg %p76
      %p83 = scmp.eq.s32.totalorder %s17, 1
      %p84 = por %p82, %p83
      %p85 = scmp.ne.s32.totalorder %s77, %s80
      %p86 = scmp.eq.s32.totalorder %s17, 0
      %p87 = por %p85, %p86
      %p88 = scmp.ne.s32.totalorder %s77, %s80
      %p89 = scmp.eq.s32.totalorder %s22, 1
      %p90 = por %p88, %p89
      %p91 = scmp.ne.s32.totalorder %s80, %s81
      %p92 = scmp.eq.s32.totalorder %s22, 0
      %p93 = por %p91, %p92
      %p94 = scmp.ne.s32.totalorder %s80, %s81
      %p95 = scmp.eq.s32.totalorder %s23, 1
      %p96 = por %p94, %p95
      %p98 = scmp.ne.s32.totalorder %s81, %s97
      %p99 = scmp.eq.s32.totalorder %s23, 0
      %p100 = por %p98, %p99
      %s101 = ssub.s32 %s24, %s36
      %p102 = scmp.eq.s32.totalorder %s101, 0
      %s104 = sadd.s32 %s103, 1
      %s105 = scalar_select %p102, %s103, %s104
      %p108 = pneg %p102
      %p109 = scmp.eq.s32.totalorder %s17, 1
      %p110 = por %p108, %p109
      %p111 = scmp.ne.s32.totalorder %s103, %s106
      %p112 = scmp.eq.s32.totalorder %s17, 0
      %p113 = por %p111, %p112
      %p114 = scmp.ne.s32.totalorder %s103, %s106
      %p115 = scmp.eq.s32.totalorder %s22, 1
      %p116 = por %p114, %p115
      %p117 = scmp.ne.s32.totalorder %s106, %s107
      %p118 = scmp.eq.s32.totalorder %s22, 0
      %p119 = por %p117, %p118
      %p120 = scmp.ne.s32.totalorder %s106, %s107
      %p121 = scmp.eq.s32.totalorder %s23, 1
      %p122 = por %p120, %p121
      %p124 = scmp.ne.s32.totalorder %s107, %s123
      %p125 = scmp.eq.s32.totalorder %s23, 0
      %p126 = por %p124, %p125
      %p127 = scmp.le.s32.totalorder 1, %s17
      %p128 = scmp.lt.s32.totalorder %s17, 3
      %p129 = pnand %p127, %p128
      %p130 = pneg %p129
      // Predicated region
      $region9: #{tpu_custom_call.1} parent=5 // pred_check
        _
      $region10: #{tpu_custom_call.1} parent=5 // pred_check_branch
        %132 = sbr.rel (%p129) target = $region12
      $region11: #{tpu_custom_call.1} parent=5 // pred_region
        %s133 = ssub.s32 %s17, 1
      $region12: #{tpu_custom_call.1} parent=5 // pred_fallthru
        _
      %p134 = scmp.lt.s32.totalorder %s17, 2
      // Predicated region
      $region13: #{tpu_custom_call.1} parent=5 // pred_check
        %p135 = pneg %p134
      $region14: #{tpu_custom_call.1} parent=5 // pred_check_branch
        %137 = sbr.rel (%p135) target = $region16
      $region15: #{tpu_custom_call.1} parent=5 // pred_region
        // Predicated region
        $region17: #{tpu_custom_call.1} parent=15 // pred_check
          %p138 = pneg %p55
        $region18: #{tpu_custom_call.1} parent=15 // pred_check_branch
          %140 = sbr.rel (%p138) target = $region20
        $region19: #{tpu_custom_call.1} parent=15 // pred_region
          %s141 = sand.u32 %s45, 1
          %s142 = scalar_lea.sflag [#allocation3], %s141
          %s143 = sand.u32 %s45, 1
          %s144 = smul.addr %s143, 16
          %s145 = scalar_lea.vmem [#allocation2], %s144
          %s146 = sadd.s32 %s24, %s25
          %p147 = scmp.lt.s32.totalorder %s146, 0
          %s148 = scalar_select %p147, %s146, 0
          %s149 = smul.u32 2, %s148
          %s151 = ssub.s32 256, 256
          %152 = vsyncadd %s142, %s151
          %s153 = smul.addr %s149, 128
          %s154 = scalar_lea.hbm %s0, %s153
          %s155 = sshll.u32 %s145, 4
          %s156 = int_to_ptr.vmem [resolvable:$true] %s155
          %161 = dma.hbm_to_vmem [thread:$0]  %s154, 256, %s156, %s142, 128, 128, 8
        $region20: #{tpu_custom_call.1} parent=15 // pred_fallthru
          _
        // Predicated region
        $region21: #{tpu_custom_call.1} parent=15 // pred_check
          %p162 = pneg %p87
        $region22: #{tpu_custom_call.1} parent=15 // pred_check_branch
          %164 = sbr.rel (%p162) target = $region24
        $region23: #{tpu_custom_call.1} parent=15 // pred_region
          %s165 = sand.u32 %s77, 1
          %s166 = scalar_lea.sflag [#allocation6], %s165
          %s167 = sand.u32 %s77, 1
          %s168 = smul.addr %s167, 16
          %s169 = scalar_lea.vmem [#allocation5], %s168
          %s170 = sadd.s32 %s24, %s25
          %p171 = scmp.lt.s32.totalorder %s170, 0
          %s172 = scalar_select %p171, %s170, 0
          %s173 = smul.u32 2, %s172
          %s175 = ssub.s32 256, 256
          %176 = vsyncadd %s166, %s175
          %s177 = smul.addr %s173, 128
          %s178 = scalar_lea.hbm %s1, %s177
          %s179 = sshll.u32 %s169, 4
          %s180 = int_to_ptr.vmem [resolvable:$true] %s179
          %185 = dma.hbm_to_vmem [thread:$0]  %s178, 256, %s180, %s166, 128, 128, 8
        $region24: #{tpu_custom_call.1} parent=15 // pred_fallthru
          _
      $region16: #{tpu_custom_call.1} parent=5 // pred_fallthru
        _
      %p186 = scmp.le.s32.totalorder 1, %s17
      %p187 = scmp.lt.s32.totalorder %s17, 3
      %p188 = pnand %p186, %p187
      %p189 = pneg %p188
      // Predicated region
      $region25: #{tpu_custom_call.1} parent=5 // pred_check
        _
      $region26: #{tpu_custom_call.1} parent=5 // pred_check_branch
        %191 = sbr.rel (%p188) target = $region28
      $region27: #{tpu_custom_call.1} parent=5 // pred_region
        %s192 = ssub.s32 %s17, 1
        %s193 = sand.u32 %s48, 1
        %s194 = scalar_lea.sflag [#allocation3], %s193
        %s195 = sand.u32 %s48, 1
        %s196 = smul.addr %s195, 16
        %s197 = scalar_lea.vmem [#allocation2], %s196
        // Predicated region
        $region29: #{tpu_custom_call.1} parent=27 // pred_check
          %p198 = pneg %p61
        $region30: #{tpu_custom_call.1} parent=27 // pred_check_branch
          %200 = sbr.rel (%p198) target = $region32
        $region31: #{tpu_custom_call.1} parent=27 // pred_region
          %201 = dma.done %s194, 256
        $region32: #{tpu_custom_call.1} parent=27 // pred_fallthru
          _
        %s202 = sand.u32 %s80, 1
        %s203 = scalar_lea.sflag [#allocation6], %s202
        %s204 = sand.u32 %s80, 1
        %s205 = smul.addr %s204, 16
        %s206 = scalar_lea.vmem [#allocation5], %s205
        // Predicated region
        $region33: #{tpu_custom_call.1} parent=27 // pred_check
          %p207 = pneg %p93
        $region34: #{tpu_custom_call.1} parent=27 // pred_check_branch
          %209 = sbr.rel (%p207) target = $region36
        $region35: #{tpu_custom_call.1} parent=27 // pred_region
          %210 = dma.done %s203, 256
        $region36: #{tpu_custom_call.1} parent=27 // pred_fallthru
          _
        %s211 = sand.u32 %s48, 1
        %s212 = scalar_lea.sflag [#allocation3], %s211
        %s213 = sand.u32 %s48, 1
        %s214 = smul.addr %s213, 16
        %s215 = scalar_lea.vmem [#allocation2], %s214
        %p216 = pneg %p61
        %p217 = pneg %p58
        %s218 = sand.u32 %s80, 1
        %s219 = scalar_lea.sflag [#allocation6], %s218
        %s220 = sand.u32 %s80, 1
        %s221 = smul.addr %s220, 16
        %s222 = scalar_lea.vmem [#allocation5], %s221
        %p223 = pneg %p93
        %p224 = pneg %p90
        %p225 = pneg %p119
        %p226 = pneg %p116
        %s227 = sand.u32 %s106, 1
        %s228 = scalar_lea.sflag [#allocation4], %s227
        %s229 = sand.u32 %s106, 1
        %s230 = smul.addr %s229, 8
        %s231 = scalar_lea.vmem [#allocation7], %s230
        %s232 = sadd.s32 %s26, %s27
        %p233 = scmp.lt.s32.totalorder %s232, 0
        %s234 = scalar_select %p233, %s232, 0
        %s235 = smul.u32 2, %s234
        %s236 = sadd.s32 %s26, %s27
        %p237 = scmp.lt.s32.totalorder %s236, 0
        %s238 = scalar_select %p237, %s236, 0
        %s239 = smul.u32 2, %s238
        %p240 = scmp.eq.s32.totalorder %s27, 0
        // Predicated region
        $region37: #{tpu_custom_call.1} parent=27 // pred_check
          %p241 = pneg %p240
        $region38: #{tpu_custom_call.1} parent=27 // pred_check_branch
          %243 = sbr.rel (%p241) target = $region40
        $region39: #{tpu_custom_call.1} parent=27 // pred_region
          %244 = vst [vmem:[%s231] sm:$0xff] 0.0
        $region40: #{tpu_custom_call.1} parent=27 // pred_fallthru
          _
        %v245 = vld [vmem:[%s197] sm:$0xff]
        %v246 = vld [vmem:[%s197 + $0x8] sm:$0xff]
        %v247 = vld [vmem:[%s206] sm:$0xff]
        %v248 = vld [vmem:[%s206 + $0x8] sm:$0xff]
        %v249 = vsub.f32 %v245, %v247
        %v250 = vsub.f32 %v246, %v248
        %v251 = vmul.f32 %v249, %v249
        %v252 = vmul.f32 %v250, %v250
        %s253 = sadd.s32 %s26, %s27
        %s254 = smul.u32 %s253, 16
        %v255 = vlaneseq
        %v256 = vshrl.u32 %v255, 7
        %v257 = vadd.s32 %v256, 8
        %v258 = vstv %s254
        %v259 = vadd.s32 %v258, %v256
        %v260 = vadd.s32 %v258, %v257
        %vm261 = vcmp.lt.s32.totalorder %v259, 16
        %vm262 = vcmp.lt.s32.totalorder %v260, 16
        %v263 = vsel %vm261, 1, 0
        %v264 = vsel %vm262, 1, 0
        %vm265 = vcmp.eq.s32.totalorder %v263, 1
        %vm266 = vcmp.eq.s32.totalorder %v264, 1
        %v267 = vsel %vm265, %v251, 0.0
        %v268 = vsel %vm266, %v252, 0.0
        %v269 = vld [vmem:[%s231] sm:$0xff]
        %v270 = vadd.f32 %v267, %v268
        %v271 = vadd.f32 %v269, %v270
        %272 = vst [vmem:[%s231] sm:$0xff] %v271
        %s273 = sand.u32 %s106, 1
        %s274 = scalar_lea.sflag [#allocation4], %s273
        %s275 = sand.u32 %s106, 1
        %s276 = smul.addr %s275, 8
        %s277 = scalar_lea.vmem [#allocation7], %s276
        // Predicated region
        $region41: #{tpu_custom_call.1} parent=27 // pred_check
          %p278 = pneg %p116
        $region42: #{tpu_custom_call.1} parent=27 // pred_check_branch
          %280 = sbr.rel (%p278) target = $region44
        $region43: #{tpu_custom_call.1} parent=27 // pred_region
          %s282 = ssub.s32 128, 128
          %283 = vsyncadd %s274, %s282
          %s284 = smul.addr %s26, 128
          %s285 = scalar_lea.hbm %s2, %s284
          %s287 = sshll.u32 %s277, 4
          %s288 = int_to_ptr.vmem [resolvable:$true] %s287
          %290 = dma.vmem_to_hbm [thread:$0]  %s288, 128, %s285, %s274
        $region44: #{tpu_custom_call.1} parent=27 // pred_fallthru
          _
      $region28: #{tpu_custom_call.1} parent=5 // pred_fallthru
        _
      %p291 = scmp.le.s32.totalorder 2, %s17
      // Predicated region
      $region45: #{tpu_custom_call.1} parent=5 // pred_check
        %p292 = pneg %p291
      $region46: #{tpu_custom_call.1} parent=5 // pred_check_branch
        %294 = sbr.rel (%p292) target = $region48
      $region47: #{tpu_custom_call.1} parent=5 // pred_region
        %s295 = ssub.s32 %s17, 2
        // Predicated region
        $region49: #{tpu_custom_call.1} parent=47 // pred_check
          %p296 = pneg %p122
        $region50: #{tpu_custom_call.1} parent=47 // pred_check_branch
          %298 = sbr.rel (%p296) target = $region52
        $region51: #{tpu_custom_call.1} parent=47 // pred_region
          %s299 = sand.u32 %s107, 1
          %s300 = scalar_lea.sflag [#allocation4], %s299
          %s301 = sand.u32 %s107, 1
          %s302 = smul.addr %s301, 8
          %s303 = scalar_lea.vmem [#allocation7], %s302
          %304 = dma.done %s300, 128
        $region52: #{tpu_custom_call.1} parent=47 // pred_fallthru
          _
      $region48: #{tpu_custom_call.1} parent=5 // pred_fallthru
        _
    $region6: #{tpu_custom_call.1} parent=1 // loop_footer
      %s21 = sadd.s32 1, %s17
    $region7: #{tpu_custom_call.1} parent=1 // loop_footer_branch
      %16 = sbr.rel target = $region3
    $region8: #{tpu_custom_call.1} parent=1 // loop_exit
      _
    %305 = vsyncpa [#allocation3], 1
    %s306 = scalar_lea.sflag [#allocation3], 1
    %307 = vsyncpa %s306, 1
    %308 = vsyncpa [#allocation6], 1
    %s309 = scalar_lea.sflag [#allocation6], 1
    %310 = vsyncpa %s309, 1
    %311 = vsyncpa [#allocation4], 1
    %s312 = scalar_lea.sflag [#allocation4], 1
    %313 = vsyncpa %s312, 1

</llo_original>
